<compile_context>
chip_gen: v6e
topology: v6e:2x2x1
jax: 0.10.0
libtpu: 0.0.40
codegen_flags: <defaults>
</compile_context>

<pallas_src>
import jax
import jax.numpy as jnp
from jax.experimental import pallas as pl
from jax.experimental.pallas import tpu as pltpu


def _round_up(a, m):
    return ((a + m - 1) // m) * m


def _mlp_kernel(x_ref,
                w1_ref, b1_ref,
                w2_ref, b2_ref,
                w3_ref, b3_ref,
                w4_ref, b4_ref,
                o_ref):
    # Feature-major: x tile is (8, TILE_B) bf16; batch on the lane axis.
    x = x_ref[...]

    # Layer 1: (64,8) @ (8,TILE_B) -> (64,TILE_B); bias+ReLU in f32 on the VPU.
    h = jnp.dot(w1_ref[...], x, preferred_element_type=jnp.float32) + b1_ref[...]
    h = jnp.maximum(h, 0.0)

    # Layer 2: (32,64) @ (64,TILE_B)
    h = jnp.dot(w2_ref[...], h.astype(jnp.bfloat16),
                preferred_element_type=jnp.float32) + b2_ref[...]
    h = jnp.maximum(h, 0.0)

    # Layer 3: (16,32) @ (32,TILE_B)
    h = jnp.dot(w3_ref[...], h.astype(jnp.bfloat16),
                preferred_element_type=jnp.float32) + b3_ref[...]
    h = jnp.maximum(h, 0.0)

    # Output layer (padded 7->8 rows for an aligned store path), no activation.
    o_ref[...] = (jnp.dot(w4_ref[...], h.astype(jnp.bfloat16),
                          preferred_element_type=jnp.float32)
                  + b4_ref[...]).astype(o_ref.dtype)

    # TODO(synk): training-mode dropout (pltpu.prng_seed + stateful_bernoulli)
    # is not implemented; forward matches PyTorch eval() semantics.


def pack_params(params):
    """Pre-pack PyTorch-layout params ONCE (call outside the per-step path).

    Input: (w1,b1,w2,b2,w3,b3,w4,b4) with weights (out, in) f32, biases (out,).
    Output: bf16 weights with w1 padded to (64, 8) in-features and w4/b4 padded
    to 8 out-features; f32 biases reshaped to (out, 1).
    """
    w1, b1, w2, b2, w3, b3, w4, b4 = params
    w1p = jnp.pad(w1, ((0, 0), (0, 2)))     # 6 -> 8 input features (zero cols)
    w4p = jnp.pad(w4, ((0, 1), (0, 0)))     # 7 -> 8 output rows
    b4p = jnp.pad(b4, ((0, 1),))
    ws = [w.astype(jnp.bfloat16) for w in (w1p, w2, w3, w4p)]
    bs = [b.astype(jnp.float32).reshape(-1, 1) for b in (b1, b2, b3, b4p)]
    return (ws[0], bs[0], ws[1], bs[1], ws[2], bs[2], ws[3], bs[3])


def pet_matching_forward_feature_major(xt, packed, *, tile_b=65536,
                                       out_dtype=jnp.float32):
    """Zero-relayout path.

    xt: (8, B) bf16 feature-major (rows 0..5 = features, rows 6..7 = zeros).
        B ideally a multiple of 128 for unmasked lane-dense stores.
    Returns (8, B) out_dtype; rows 0..6 are the 7 logits, row 7 is padding.
    """
    w1, b1, w2, b2, w3, b3, w4, b4 = packed
    b_total = xt.shape[1]

    # Batch tile: multiple of 128 lanes, capped at tile_b and at the batch.
    tile = max(128, _round_up(min(tile_b, b_total), 128))
    grid = (pl.cdiv(b_total, tile),)

    const = lambda i: (0, 0)  # weights/biases: resident, never re-DMA'd

    flops = 2 * b_total * (8 * 64 + 64 * 32 + 32 * 16 + 16 * 8)
    param_bytes = sum(int(a.size) * a.dtype.itemsize for a in packed)
    out_itemsize = jnp.dtype(out_dtype).itemsize
    bytes_accessed = 2 * 8 * b_total + out_itemsize * 8 * b_total + param_bytes

    return pl.pallas_call(
        _mlp_kernel,
        out_shape=jax.ShapeDtypeStruct((8, b_total), out_dtype),
        grid=grid,
        in_specs=[
            pl.BlockSpec((8, tile), lambda i: (0, i)),       # streamed x tile
            pl.BlockSpec((64, 8), const), pl.BlockSpec((64, 1), const),
            pl.BlockSpec((32, 64), const), pl.BlockSpec((32, 1), const),
            pl.BlockSpec((16, 32), const), pl.BlockSpec((16, 1), const),
            pl.BlockSpec((8, 16), const), pl.BlockSpec((8, 1), const),
        ],
        out_specs=pl.BlockSpec((8, tile), lambda i: (0, i)),
        compiler_params=pltpu.CompilerParams(
            dimension_semantics=("parallel",)),
        cost_estimate=pl.CostEstimate(
            flops=flops, transcendentals=0, bytes_accessed=bytes_accessed),
    )(xt, w1, b1, w2, b2, w3, b3, w4, b4)


def pet_matching_forward(x, packed, *, tile_b=65536, out_dtype=jnp.float32):
    """PyTorch-like interface.  x: [B, 6] float32.  Returns [B, 7].

    `packed` comes from pack_params().  Prefer the feature-major entry point
    when the caller can keep data as (features, batch) to avoid the transpose.
    """
    B = x.shape[0]
    b_pad = _round_up(max(B, 1), 128)   # only pad to 128 lanes, not to tile

    # Feature-major (8, b_pad) bf16: 2 zero feature rows + zero batch columns.
    xt = jnp.pad(x.T.astype(jnp.bfloat16), ((0, 2), (0, b_pad - B)))

    out = pet_matching_forward_feature_major(
        xt, packed, tile_b=tile_b, out_dtype=out_dtype)

    # Drop the padded output row and padded batch columns; back to [B, 7].
    return out[:7, :B].T


def init_params(key):
    """PyTorch-style Linear init (U[-1/sqrt(in), 1/sqrt(in)]), PyTorch layout:
    weights (out_features, in_features), biases (out_features,)."""
    dims = [(6, 64), (64, 32), (32, 16), (16, 7)]
    params = []
    for fan_in, fan_out in dims:
        key, kw, kb = jax.random.split(key, 3)
        bound = 1.0 / jnp.sqrt(float(fan_in))
        w = jax.random.uniform(kw, (fan_out, fan_in), jnp.float32, -bound, bound)
        b = jax.random.uniform(kb, (fan_out,), jnp.float32, -bound, bound)
        params += [w, b]
    return tuple(params)


def _reference_forward_bf16(x, params):
    """Pure-JAX reference mirroring the kernel's bf16-operand / f32-accum math."""
    w1, b1, w2, b2, w3, b3, w4, b4 = params
    bf, f32 = jnp.bfloat16, jnp.float32
    h = jnp.maximum(jnp.dot(x.astype(bf), w1.astype(bf).T,
                            preferred_element_type=f32) + b1, 0.0)
    h = jnp.maximum(jnp.dot(h.astype(bf), w2.astype(bf).T,
                            preferred_element_type=f32) + b2, 0.0)
    h = jnp.maximum(jnp.dot(h.astype(bf), w3.astype(bf).T,
                            preferred_element_type=f32) + b3, 0.0)
    return jnp.dot(h.astype(bf), w4.astype(bf).T,
                   preferred_element_type=f32) + b4


def _reference_forward_f32(x, params):
    """Full-f32 reference (PyTorch eval-mode semantics)."""
    w1, b1, w2, b2, w3, b3, w4, b4 = params
    h = jnp.maximum(x @ w1.T + b1, 0.0)
    h = jnp.maximum(h @ w2.T + b2, 0.0)
    h = jnp.maximum(h @ w3.T + b3, 0.0)
    return h @ w4.T + b4


if __name__ == "__main__":
    key = jax.random.PRNGKey(0)
    key, kx = jax.random.split(key)

    batch = 8
    x = jax.random.normal(kx, (batch, 6), jnp.float32)
    params = init_params(key)
    packed = pack_params(params)   # packed once, reused for every forward

    out = jax.block_until_ready(pet_matching_forward(x, packed))
    assert out.shape == (batch, 7)

    # Exact-path check against a bf16-operand reference.
    ref_bf16 = _reference_forward_bf16(x, params)
    assert jnp.allclose(out, ref_bf16, atol=2e-3, rtol=2e-3), "bf16-path mismatch"

    # Sanity check against the full-f32 PyTorch-semantics reference.
    ref_f32 = _reference_forward_f32(x, params)
    assert jnp.allclose(out, ref_f32, atol=5e-2, rtol=5e-2), "f32 reference mismatch"

    # Exercise a multi-step grid with a ragged (partial) last block:
    # B=300 -> padded to 384 lanes, tile=256 -> 2 grid steps, last one partial.
    key, kx2 = jax.random.split(key)
    x2 = jax.random.normal(kx2, (300, 6), jnp.float32)
    out2 = jax.block_until_ready(pet_matching_forward(x2, packed, tile_b=256))
    assert out2.shape == (300, 7)
    ref2 = _reference_forward_f32(x2, params)
    assert jnp.allclose(out2, ref2, atol=5e-2, rtol=5e-2), "ragged-tile mismatch"

    print("KERNEL_OK")
</pallas_src>

<mosaic_0001>
module attributes {stable_mosaic.version = 11 : i64} {
  func.func @_mlp_kernel(%arg0: i32, %arg1: memref<8x128xbf16, #tpu.memory_space<vmem>>, %arg2: memref<64x8xbf16, #tpu.memory_space<vmem>>, %arg3: memref<64x1xf32, #tpu.memory_space<vmem>>, %arg4: memref<32x64xbf16, #tpu.memory_space<vmem>>, %arg5: memref<32x1xf32, #tpu.memory_space<vmem>>, %arg6: memref<16x32xbf16, #tpu.memory_space<vmem>>, %arg7: memref<16x1xf32, #tpu.memory_space<vmem>>, %arg8: memref<8x16xbf16, #tpu.memory_space<vmem>>, %arg9: memref<8x1xf32, #tpu.memory_space<vmem>>, %arg10: memref<8x128xf32, #tpu.memory_space<vmem>>) attributes {dimension_semantics = [#tpu.dimension_semantics<parallel>], iteration_bounds = array<i64: 1>, scalar_prefetch = 0 : i64, scratch_operands = 0 : i64, tpu.core_type = #tpu.core_type<tc>, window_params = [{transform_indices = @transform_0, window_bounds = array<i64: 8, 128>}, {pipeline_mode = #tpu.pipeline_mode<synchronous>, transform_indices = @transform_1, window_bounds = array<i64: 64, 8>}, {pipeline_mode = #tpu.pipeline_mode<synchronous>, transform_indices = @transform_2, window_bounds = array<i64: 64, 1>}, {pipeline_mode = #tpu.pipeline_mode<synchronous>, transform_indices = @transform_3, window_bounds = array<i64: 32, 64>}, {pipeline_mode = #tpu.pipeline_mode<synchronous>, transform_indices = @transform_4, window_bounds = array<i64: 32, 1>}, {pipeline_mode = #tpu.pipeline_mode<synchronous>, transform_indices = @transform_5, window_bounds = array<i64: 16, 32>}, {pipeline_mode = #tpu.pipeline_mode<synchronous>, transform_indices = @transform_6, window_bounds = array<i64: 16, 1>}, {pipeline_mode = #tpu.pipeline_mode<synchronous>, transform_indices = @transform_7, window_bounds = array<i64: 8, 16>}, {pipeline_mode = #tpu.pipeline_mode<synchronous>, transform_indices = @transform_8, window_bounds = array<i64: 8, 1>}, {transform_indices = @transform_9, window_bounds = array<i64: 8, 128>}]} {
    %c0 = arith.constant 0 : index
    %c0_0 = arith.constant 0 : index
    %0 = vector.load %arg1[%c0, %c0_0] : memref<8x128xbf16, #tpu.memory_space<vmem>>, vector<8x128xbf16>
    %c0_1 = arith.constant 0 : index
    %c0_2 = arith.constant 0 : index
    %1 = vector.load %arg2[%c0_1, %c0_2] : memref<64x8xbf16, #tpu.memory_space<vmem>>, vector<64x8xbf16>
    %cst = arith.constant dense<0.000000e+00> : vector<64x128xf32>
    %2 = tpu.matmul %1, %0, %cst {dimension_numbers = #tpu.dot_dimension_numbers<[1], [0], [0], [1], [0, 0, 1, 1], [], []>} : vector<64x8xbf16>, vector<8x128xbf16>, vector<64x128xf32> -> vector<64x128xf32>
    %c0_3 = arith.constant 0 : index
    %c0_4 = arith.constant 0 : index
    %3 = vector.load %arg3[%c0_3, %c0_4] : memref<64x1xf32, #tpu.memory_space<vmem>>, vector<64x1xf32>
    %4 = vector.broadcast %3 : vector<64x1xf32> to vector<64x128xf32>
    %5 = arith.addf %2, %4 : vector<64x128xf32>
    %cst_5 = arith.constant 0.000000e+00 : f32
    %6 = vector.broadcast %cst_5 : f32 to vector<64x128xf32>
    %7 = arith.maximumf %5, %6 : vector<64x128xf32>
    %c0_6 = arith.constant 0 : index
    %c0_7 = arith.constant 0 : index
    %8 = vector.load %arg4[%c0_6, %c0_7] : memref<32x64xbf16, #tpu.memory_space<vmem>>, vector<32x64xbf16>
    %9 = arith.truncf %7 : vector<64x128xf32> to vector<64x128xbf16>
    %cst_8 = arith.constant dense<0.000000e+00> : vector<32x128xf32>
    %10 = tpu.matmul %8, %9, %cst_8 {dimension_numbers = #tpu.dot_dimension_numbers<[1], [0], [0], [1], [0, 0, 1, 1], [], []>} : vector<32x64xbf16>, vector<64x128xbf16>, vector<32x128xf32> -> vector<32x128xf32>
    %c0_9 = arith.constant 0 : index
    %c0_10 = arith.constant 0 : index
    %11 = vector.load %arg5[%c0_9, %c0_10] : memref<32x1xf32, #tpu.memory_space<vmem>>, vector<32x1xf32>
    %12 = vector.broadcast %11 : vector<32x1xf32> to vector<32x128xf32>
    %13 = arith.addf %10, %12 : vector<32x128xf32>
    %cst_11 = arith.constant 0.000000e+00 : f32
    %14 = vector.broadcast %cst_11 : f32 to vector<32x128xf32>
    %15 = arith.maximumf %13, %14 : vector<32x128xf32>
    %c0_12 = arith.constant 0 : index
    %c0_13 = arith.constant 0 : index
    %16 = vector.load %arg6[%c0_12, %c0_13] : memref<16x32xbf16, #tpu.memory_space<vmem>>, vector<16x32xbf16>
    %17 = arith.truncf %15 : vector<32x128xf32> to vector<32x128xbf16>
    %cst_14 = arith.constant dense<0.000000e+00> : vector<16x128xf32>
    %18 = tpu.matmul %16, %17, %cst_14 {dimension_numbers = #tpu.dot_dimension_numbers<[1], [0], [0], [1], [0, 0, 1, 1], [], []>} : vector<16x32xbf16>, vector<32x128xbf16>, vector<16x128xf32> -> vector<16x128xf32>
    %c0_15 = arith.constant 0 : index
    %c0_16 = arith.constant 0 : index
    %19 = vector.load %arg7[%c0_15, %c0_16] : memref<16x1xf32, #tpu.memory_space<vmem>>, vector<16x1xf32>
    %20 = vector.broadcast %19 : vector<16x1xf32> to vector<16x128xf32>
    %21 = arith.addf %18, %20 : vector<16x128xf32>
    %cst_17 = arith.constant 0.000000e+00 : f32
    %22 = vector.broadcast %cst_17 : f32 to vector<16x128xf32>
    %23 = arith.maximumf %21, %22 : vector<16x128xf32>
    %c0_18 = arith.constant 0 : index
    %c0_19 = arith.constant 0 : index
    %24 = vector.load %arg8[%c0_18, %c0_19] : memref<8x16xbf16, #tpu.memory_space<vmem>>, vector<8x16xbf16>
    %25 = arith.truncf %23 : vector<16x128xf32> to vector<16x128xbf16>
    %cst_20 = arith.constant dense<0.000000e+00> : vector<8x128xf32>
    %26 = tpu.matmul %24, %25, %cst_20 {dimension_numbers = #tpu.dot_dimension_numbers<[1], [0], [0], [1], [0, 0, 1, 1], [], []>} : vector<8x16xbf16>, vector<16x128xbf16>, vector<8x128xf32> -> vector<8x128xf32>
    %c0_21 = arith.constant 0 : index
    %c0_22 = arith.constant 0 : index
    %27 = vector.load %arg9[%c0_21, %c0_22] : memref<8x1xf32, #tpu.memory_space<vmem>>, vector<8x1xf32>
    %28 = vector.broadcast %27 : vector<8x1xf32> to vector<8x128xf32>
    %29 = arith.addf %26, %28 : vector<8x128xf32>
    %c0_23 = arith.constant 0 : index
    %c0_24 = arith.constant 0 : index
    %30 = vector.load %arg10[%c0_23, %c0_24] : memref<8x128xf32, #tpu.memory_space<vmem>>, vector<8x128xf32>
    tpu.vector_store %arg10[%c0_23, %c0_24], %29 {strides = array<i32>} : memref<8x128xf32, #tpu.memory_space<vmem>>, vector<8x128xf32>,
    return
  }
  func.func @transform_0(%arg0: i32) -> (i32, i32) {
    %c0_i32 = arith.constant 0 : i32
    %c0_i32_0 = arith.constant 0 : i32
    return %c0_i32, %arg0 : i32, i32
  }
  func.func @transform_1(%arg0: i32) -> (i32, i32) {
    %c0_i32 = arith.constant 0 : i32
    %c0_i32_0 = arith.constant 0 : i32
    %c0_i32_1 = arith.constant 0 : i32
    return %c0_i32, %c0_i32_0 : i32, i32
  }
  func.func @transform_2(%arg0: i32) -> (i32, i32) {
    %c0_i32 = arith.constant 0 : i32
    %c0_i32_0 = arith.constant 0 : i32
    %c0_i32_1 = arith.constant 0 : i32
    return %c0_i32, %c0_i32_0 : i32, i32
  }
  func.func @transform_3(%arg0: i32) -> (i32, i32) {
    %c0_i32 = arith.constant 0 : i32
    %c0_i32_0 = arith.constant 0 : i32
    %c0_i32_1 = arith.constant 0 : i32
    return %c0_i32, %c0_i32_0 : i32, i32
  }
  func.func @transform_4(%arg0: i32) -> (i32, i32) {
    %c0_i32 = arith.constant 0 : i32
    %c0_i32_0 = arith.constant 0 : i32
    %c0_i32_1 = arith.constant 0 : i32
    return %c0_i32, %c0_i32_0 : i32, i32
  }
  func.func @transform_5(%arg0: i32) -> (i32, i32) {
    %c0_i32 = arith.constant 0 : i32
    %c0_i32_0 = arith.constant 0 : i32
    %c0_i32_1 = arith.constant 0 : i32
    return %c0_i32, %c0_i32_0 : i32, i32
  }
  func.func @transform_6(%arg0: i32) -> (i32, i32) {
    %c0_i32 = arith.constant 0 : i32
    %c0_i32_0 = arith.constant 0 : i32
    %c0_i32_1 = arith.constant 0 : i32
    return %c0_i32, %c0_i32_0 : i32, i32
  }
  func.func @transform_7(%arg0: i32) -> (i32, i32) {
    %c0_i32 = arith.constant 0 : i32
    %c0_i32_0 = arith.constant 0 : i32
    %c0_i32_1 = arith.constant 0 : i32
    return %c0_i32, %c0_i32_0 : i32, i32
  }
  func.func @transform_8(%arg0: i32) -> (i32, i32) {
    %c0_i32 = arith.constant 0 : i32
    %c0_i32_0 = arith.constant 0 : i32
    %c0_i32_1 = arith.constant 0 : i32
    return %c0_i32, %c0_i32_0 : i32, i32
  }
  func.func @transform_9(%arg0: i32) -> (i32, i32) {
    %c0_i32 = arith.constant 0 : i32
    %c0_i32_0 = arith.constant 0 : i32
    return %c0_i32, %arg0 : i32, i32
  }
}

</mosaic_0001>

<llo_original>
// kernel: tpu_custom_call.1
$region0: #{tpu_custom_call.1}
  #allocation0 [shape = 'u32[]', space=smem, size = 0x4, offset = 0x4, fixed_abs, tag = 'smem constant byte address 0x4 - core index']
  #allocation1 [shape = 'u32[144,128]{1,0:T(1,128)}', space=vmem, size = 0x12000, scoped, tag = 'internal scratch']
  %s0 = inlined_call_operand.vmem [shape: bf16[8,128], index: 0, kind: input, shape index: {}]
  %s1 = inlined_call_operand.vmem [shape: bf16[64,8], index: 1, kind: input, shape index: {}]
  %s2 = inlined_call_operand.vmem [shape: f32[64,1], index: 2, kind: input, shape index: {}]
  %s3 = inlined_call_operand.vmem [shape: bf16[32,64], index: 3, kind: input, shape index: {}]
  %s4 = inlined_call_operand.vmem [shape: f32[32,1], index: 4, kind: input, shape index: {}]
  %s5 = inlined_call_operand.vmem [shape: bf16[16,32], index: 5, kind: input, shape index: {}]
  %s6 = inlined_call_operand.vmem [shape: f32[16,1], index: 6, kind: input, shape index: {}]
  %s7 = inlined_call_operand.vmem [shape: bf16[8,16], index: 7, kind: input, shape index: {}]
  %s8 = inlined_call_operand.vmem [shape: f32[8,1], index: 8, kind: input, shape index: {}]
  %s9 = inlined_call_operand.hbm [shape: f32[8,128], index: 9, kind: output, shape index: {}]
  %s10 = sld [smem:[#allocation0]]
  $region46: #{tpu_custom_call.1} parent=0
    _
  %s12 = ssub.s32 1, %s10
  %s13 = scalar_select 0, %s12, %s10
  $region1: #{tpu_custom_call.1} parent=0
    #allocation2 [shape = 'u8[4096]{0}', space=vmem, size = 0x1000, scoped, tag = 'output window, operand 0, single buffered']
    #allocation3 [shape = 's32[1]{0}', space=sflag, size = 0x4, scoped, tag = 'scoped memory for tpu_custom_call.1']
    %14 = vsyncpa [#allocation3], 0
    // Predicated region
    $region2: #{tpu_custom_call.1} parent=1 // pred_check
      _
    $region3: #{tpu_custom_call.1} parent=1 // pred_check_branch
      %16 = sbr.rel (0) target = $region5
    $region4: #{tpu_custom_call.1} parent=1 // pred_region
      _
    $region5: #{tpu_custom_call.1} parent=1 // pred_fallthru
      _
    // Predicated region
    $region6: #{tpu_custom_call.1} parent=1 // pred_check
      _
    $region7: #{tpu_custom_call.1} parent=1 // pred_check_branch
      %18 = sbr.rel (0) target = $region9
    $region8: #{tpu_custom_call.1} parent=1 // pred_region
      _
    $region9: #{tpu_custom_call.1} parent=1 // pred_fallthru
      _
    // Predicated region
    $region10: #{tpu_custom_call.1} parent=1 // pred_check
      _
    $region11: #{tpu_custom_call.1} parent=1 // pred_check_branch
      %20 = sbr.rel (0) target = $region13
    $region12: #{tpu_custom_call.1} parent=1 // pred_region
      _
    $region13: #{tpu_custom_call.1} parent=1 // pred_fallthru
      _
    // Predicated region
    $region14: #{tpu_custom_call.1} parent=1 // pred_check
      _
    $region15: #{tpu_custom_call.1} parent=1 // pred_check_branch
      %22 = sbr.rel (0) target = $region17
    $region16: #{tpu_custom_call.1} parent=1 // pred_region
      _
    $region17: #{tpu_custom_call.1} parent=1 // pred_fallthru
      _
    // Predicated region
    $region18: #{tpu_custom_call.1} parent=1 // pred_check
      _
    $region19: #{tpu_custom_call.1} parent=1 // pred_check_branch
      %24 = sbr.rel (0) target = $region21
    $region20: #{tpu_custom_call.1} parent=1 // pred_region
      _
    $region21: #{tpu_custom_call.1} parent=1 // pred_fallthru
      _
    // Predicated region
    $region22: #{tpu_custom_call.1} parent=1 // pred_check
      _
    $region23: #{tpu_custom_call.1} parent=1 // pred_check_branch
      %26 = sbr.rel (0) target = $region25
    $region24: #{tpu_custom_call.1} parent=1 // pred_region
      _
    $region25: #{tpu_custom_call.1} parent=1 // pred_fallthru
      _
    // Predicated region
    $region26: #{tpu_custom_call.1} parent=1 // pred_check
      _
    $region27: #{tpu_custom_call.1} parent=1 // pred_check_branch
      %28 = sbr.rel (0) target = $region29
    $region28: #{tpu_custom_call.1} parent=1 // pred_region
      _
    $region29: #{tpu_custom_call.1} parent=1 // pred_fallthru
      _
    // Predicated region
    $region30: #{tpu_custom_call.1} parent=1 // pred_check
      _
    $region31: #{tpu_custom_call.1} parent=1 // pred_check_branch
      %30 = sbr.rel (0) target = $region33
    $region32: #{tpu_custom_call.1} parent=1 // pred_region
      _
    $region33: #{tpu_custom_call.1} parent=1 // pred_fallthru
      _
    // Predicated region
    $region34: #{tpu_custom_call.1} parent=1 // pred_check
      _
    $region35: #{tpu_custom_call.1} parent=1 // pred_check_branch
      %32 = sbr.rel (0) target = $region37
    $region36: #{tpu_custom_call.1} parent=1 // pred_region
      _
    $region37: #{tpu_custom_call.1} parent=1 // pred_fallthru
      _
    %v34 = vld [vmem:[%s0] sm:$0xf]
    %v35 = vld [vmem:[%s1] sm:$0xf]
    %v36 = vld [vmem:[%s1 + $0x4] sm:$0xf]
    %v37 = vld [vmem:[%s1 + $0x8] sm:$0xf]
    %v38 = vld [vmem:[%s1 + $0xc] sm:$0xf]
    %v39 = vld [vmem:[%s1 + $0x10] sm:$0xf]
    %v40 = vld [vmem:[%s1 + $0x14] sm:$0xf]
    %v41 = vld [vmem:[%s1 + $0x18] sm:$0xf]
    %v42 = vld [vmem:[%s1 + $0x1c] sm:$0xf]
    %v43 = vld [vmem:[%s2] sm:$0xff]
    %v44 = vld [vmem:[%s2 + $0x8] sm:$0xff]
    %v45 = vld [vmem:[%s2 + $0x10] sm:$0xff]
    %v46 = vld [vmem:[%s2 + $0x18] sm:$0xff]
    %v47 = vld [vmem:[%s2 + $0x20] sm:$0xff]
    %v48 = vld [vmem:[%s2 + $0x28] sm:$0xff]
    %v49 = vld [vmem:[%s2 + $0x30] sm:$0xff]
    %v50 = vld [vmem:[%s2 + $0x38] sm:$0xff]
    %52 = vset.pattern.permute.xlu0 0
    %53 = vperm.xlu0 %52, %v43
    %v54 = vpop.permute.xlu0 %53
    %57 = vset.pattern.permute.xlu0 0
    %58 = vperm.xlu0 %57, %v44
    %v59 = vpop.permute.xlu0 %58
    %62 = vset.pattern.permute.xlu0 0
    %63 = vperm.xlu0 %62, %v45
    %v64 = vpop.permute.xlu0 %63
    %67 = vset.pattern.permute.xlu0 0
    %68 = vperm.xlu0 %67, %v46
    %v69 = vpop.permute.xlu0 %68
    %72 = vset.pattern.permute.xlu0 0
    %73 = vperm.xlu0 %72, %v47
    %v74 = vpop.permute.xlu0 %73
    %77 = vset.pattern.permute.xlu0 0
    %78 = vperm.xlu0 %77, %v48
    %v79 = vpop.permute.xlu0 %78
    %82 = vset.pattern.permute.xlu0 0
    %83 = vperm.xlu0 %82, %v49
    %v84 = vpop.permute.xlu0 %83
    %87 = vset.pattern.permute.xlu0 0
    %88 = vperm.xlu0 %87, %v50
    %v89 = vpop.permute.xlu0 %88
    %v99 = vunpack.c.l.b16 %v35
    %v100 = vunpack.c.l.b16 %v36
    %v101 = vunpack.c.l.b16 %v37
    %v102 = vunpack.c.l.b16 %v38
    %v103 = vunpack.c.l.b16 %v39
    %v104 = vunpack.c.l.b16 %v40
    %v105 = vunpack.c.l.b16 %v41
    %v106 = vunpack.c.l.b16 %v42
    %v107 = vpack.c.b16 %v100, %v99
    %v108 = vpack.c.b16 %v102, %v101
    %v109 = vpack.c.b16 %v104, %v103
    %v110 = vpack.c.b16 %v106, %v105
    %vm111 = vcmask 64512
    %v113 = vsel %vm111, %v107, 0
    %v116 = vsel %vm111, %v108, 0
    %v119 = vsel %vm111, %v109, 0
    %v122 = vsel %vm111, %v110, 0
    %vm124 = vcmask 1043456
    %v126 = vsel %vm124, %v34, 0
    %128 = vmatprep.subr.bf16.mxu0 0
    %129 = vmatpush1.bf16.msra.mxu0 0
    %130 = vmatprep.subr.bf16.mxu0 0
    %131 = vmatpush1.bf16.msra.mxu0 0
    %132 = vmatprep.subr.bf16.mxu0 0
    %133 = vmatpush1.bf16.msra.mxu0 0
    %134 = vmatprep.subr.bf16.mxu0 0
    %135 = vmatpush1.bf16.msra.mxu0 0
    %136 = vmatprep.subr.bf16.mxu0 0
    %137 = vmatpush1.bf16.msra.mxu0 0
    %138 = vmatprep.subr.bf16.mxu0 0
    %139 = vmatpush1.bf16.msra.mxu0 0
    %140 = vmatprep.subr.bf16.mxu0 0
    %141 = vmatpush1.bf16.msra.mxu0 0
    %142 = vmatprep.subr.bf16.mxu0 0
    %143 = vmatpush1.bf16.msra.mxu0 %v126
    %144 = vmatprep.subr.bf16.mxu0 0
    %145 = vmatpush2.bf16.msra.mxu0 0
    %146 = vmatprep.subr.bf16.mxu0 0
    %147 = vmatpush2.bf16.msra.mxu0 0
    %148 = vmatprep.subr.bf16.mxu0 0
    %149 = vmatpush2.bf16.msra.mxu0 0
    %150 = vmatprep.subr.bf16.mxu0 0
    %151 = vmatpush2.bf16.msra.mxu0 0
    %152 = vmatprep.subr.bf16.mxu0 0
    %153 = vmatpush2.bf16.msra.mxu0 0
    %154 = vmatprep.subr.bf16.mxu0 0
    %155 = vmatpush2.bf16.msra.mxu0 0
    %156 = vmatprep.subr.bf16.mxu0 0
    %157 = vmatpush2.bf16.msra.mxu0 0
    %158 = vmatprep.subr.bf16.mxu0 0
    %159 = vmatpush2.bf16.msra.mxu0 0
    %160 = vmatprep.mubr.bf16.mxu0 0
    %161 = vmatmul.mubr.bf16.gmra.mxu0 %v113
    %v162 = vpop.f32.mrf.mxu0
    %v163 = vadd.f32 %v54, %v162
    %v164 = vpop.f32.mrf.mxu0
    %v165 = vpop.f32.mrf.mxu0
    %v166 = vadd.f32 %v59, %v165
    %v167 = vpop.f32.mrf.mxu0
    %168 = vmatprep.mubr.bf16.mxu0 0
    %169 = vmatmul.mubr.bf16.gmra.mxu0 %v116
    %v170 = vpop.f32.mrf.mxu0
    %v171 = vadd.f32 %v64, %v170
    %v172 = vpop.f32.mrf.mxu0
    %v173 = vpop.f32.mrf.mxu0
    %v174 = vadd.f32 %v69, %v173
    %v175 = vpop.f32.mrf.mxu0
    %176 = vmatprep.mubr.bf16.mxu0 0
    %177 = vmatmul.mubr.bf16.gmra.mxu0 %v119
    %v178 = vpop.f32.mrf.mxu0
    %v179 = vadd.f32 %v74, %v178
    %v180 = vpop.f32.mrf.mxu0
    %v181 = vpop.f32.mrf.mxu0
    %v182 = vadd.f32 %v79, %v181
    %v183 = vpop.f32.mrf.mxu0
    %184 = vmatprep.mubr.bf16.mxu0 0
    %185 = vmatmul.mubr.bf16.gmra.mxu0 %v122
    %v186 = vpop.f32.mrf.mxu0
    %v187 = vadd.f32 %v84, %v186
    %v188 = vpop.f32.mrf.mxu0
    %v189 = vpop.f32.mrf.mxu0
    %v190 = vadd.f32 %v89, %v189
    %v191 = vpop.f32.mrf.mxu0
    %192 = vdwg.mxu0
    %v193 = vmax.f32 %v163, 0.0
    %v194 = vmax.f32 %v166, 0.0
    %v195 = vmax.f32 %v171, 0.0
    %v196 = vmax.f32 %v174, 0.0
    %v197 = vmax.f32 %v179, 0.0
    %v198 = vmax.f32 %v182, 0.0
    %v199 = vmax.f32 %v187, 0.0
    %v200 = vmax.f32 %v190, 0.0
    %v201 = vld [vmem:[%s3] sm:$0xf]
    %v202 = vld [vmem:[%s3 + $0x4] sm:$0xf]
    %v203 = vld [vmem:[%s3 + $0x8] sm:$0xf]
    %v204 = vld [vmem:[%s3 + $0xc] sm:$0xf]
    %v205 = vpack.c.bf16 %v194, %v193
    %v206 = vpack.c.bf16 %v196, %v195
    %v207 = vpack.c.bf16 %v198, %v197
    %v208 = vpack.c.bf16 %v200, %v199
    %v209 = vld [vmem:[%s4] sm:$0xff]
    %v210 = vld [vmem:[%s4 + $0x8] sm:$0xff]
    %v211 = vld [vmem:[%s4 + $0x10] sm:$0xff]
    %v212 = vld [vmem:[%s4 + $0x18] sm:$0xff]
    %214 = vset.pattern.permute.xlu0 0
    %215 = vperm.xlu0 %214, %v209
    %v216 = vpop.permute.xlu0 %215
    %219 = vset.pattern.permute.xlu0 0
    %220 = vperm.xlu0 %219, %v210
    %v221 = vpop.permute.xlu0 %220
    %224 = vset.pattern.permute.xlu0 0
    %225 = vperm.xlu0 %224, %v211
    %v226 = vpop.permute.xlu0 %225
    %229 = vset.pattern.permute.xlu0 0
    %230 = vperm.xlu0 %229, %v212
    %v231 = vpop.permute.xlu0 %230
    %v237 = vunpack.c.l.b16 %v201
    %v238 = vunpack.c.l.b16 %v202
    %v239 = vunpack.c.l.b16 %v203
    %v240 = vunpack.c.l.b16 %v204
    %v241 = vpack.c.b16 %v238, %v237
    %v242 = vpack.c.b16 %v240, %v239
    %vm243 = vcmask 523264
    %v245 = vsel %vm243, %v241, 0
    %v248 = vsel %vm243, %v242, 0
    %250 = vmatprep.subr.bf16.mxu0 0
    %251 = vmatpush1.bf16.msra.mxu0 0
    %252 = vmatprep.subr.bf16.mxu0 0
    %253 = vmatpush1.bf16.msra.mxu0 0
    %254 = vmatprep.subr.bf16.mxu0 0
    %255 = vmatpush1.bf16.msra.mxu0 0
    %256 = vmatprep.subr.bf16.mxu0 0
    %257 = vmatpush1.bf16.msra.mxu0 0
    %258 = vmatprep.subr.bf16.mxu0 0
    %259 = vmatpush1.bf16.msra.mxu0 %v208
    %260 = vmatprep.subr.bf16.mxu0 0
    %261 = vmatpush1.bf16.msra.mxu0 %v207
    %262 = vmatprep.subr.bf16.mxu0 0
    %263 = vmatpush1.bf16.msra.mxu0 %v206
    %264 = vmatprep.subr.bf16.mxu0 0
    %265 = vmatpush1.bf16.msra.mxu0 %v205
    %266 = vmatprep.subr.bf16.mxu0 0
    %267 = vmatpush2.bf16.msra.mxu0 0
    %268 = vmatprep.subr.bf16.mxu0 0
    %269 = vmatpush2.bf16.msra.mxu0 0
    %270 = vmatprep.subr.bf16.mxu0 0
    %271 = vmatpush2.bf16.msra.mxu0 0
    %272 = vmatprep.subr.bf16.mxu0 0
    %273 = vmatpush2.bf16.msra.mxu0 0
    %274 = vmatprep.subr.bf16.mxu0 0
    %275 = vmatpush2.bf16.msra.mxu0 0
    %276 = vmatprep.subr.bf16.mxu0 0
    %277 = vmatpush2.bf16.msra.mxu0 0
    %278 = vmatprep.subr.bf16.mxu0 0
    %279 = vmatpush2.bf16.msra.mxu0 0
    %280 = vmatprep.subr.bf16.mxu0 0
    %281 = vmatpush2.bf16.msra.mxu0 0
    %282 = vmatprep.mubr.bf16.mxu0 0
    %283 = vmatmul.mubr.bf16.gmra.mxu0 %v245
    %v284 = vpop.f32.mrf.mxu0
    %v285 = vadd.f32 %v216, %v284
    %v286 = vpop.f32.mrf.mxu0
    %v287 = vpop.f32.mrf.mxu0
    %v288 = vadd.f32 %v221, %v287
    %v289 = vpop.f32.mrf.mxu0
    %290 = vmatprep.mubr.bf16.mxu0 0
    %291 = vmatmul.mubr.bf16.gmra.mxu0 %v248
    %v292 = vpop.f32.mrf.mxu0
    %v293 = vadd.f32 %v226, %v292
    %v294 = vpop.f32.mrf.mxu0
    %v295 = vpop.f32.mrf.mxu0
    %v296 = vadd.f32 %v231, %v295
    %v297 = vpop.f32.mrf.mxu0
    %298 = vdwg.mxu0
    %v299 = vmax.f32 %v285, 0.0
    %v300 = vmax.f32 %v288, 0.0
    %v301 = vmax.f32 %v293, 0.0
    %v302 = vmax.f32 %v296, 0.0
    %v303 = vld [vmem:[%s5] sm:$0xf]
    %v304 = vld [vmem:[%s5 + $0x4] sm:$0xf]
    %v305 = vpack.c.bf16 %v300, %v299
    %v306 = vpack.c.bf16 %v302, %v301
    %v307 = vld [vmem:[%s6] sm:$0xff]
    %v308 = vld [vmem:[%s6 + $0x8] sm:$0xff]
    %310 = vset.pattern.permute.xlu0 0
    %311 = vperm.xlu0 %310, %v307
    %v312 = vpop.permute.xlu0 %311
    %315 = vset.pattern.permute.xlu0 0
    %316 = vperm.xlu0 %315, %v308
    %v317 = vpop.permute.xlu0 %316
    %v321 = vunpack.c.l.b16 %v303
    %v322 = vunpack.c.l.b16 %v304
    %v323 = vpack.c.b16 %v322, %v321
    %vm324 = vcmask 261120
    %v326 = vsel %vm324, %v323, 0
    %328 = vmatprep.subr.bf16.mxu0 0
    %329 = vmatpush1.bf16.msra.mxu0 0
    %330 = vmatprep.subr.bf16.mxu0 0
    %331 = vmatpush1.bf16.msra.mxu0 0
    %332 = vmatprep.subr.bf16.mxu0 0
    %333 = vmatpush1.bf16.msra.mxu0 0
    %334 = vmatprep.subr.bf16.mxu0 0
    %335 = vmatpush1.bf16.msra.mxu0 0
    %336 = vmatprep.subr.bf16.mxu0 0
    %337 = vmatpush1.bf16.msra.mxu0 0
    %338 = vmatprep.subr.bf16.mxu0 0
    %339 = vmatpush1.bf16.msra.mxu0 0
    %340 = vmatprep.subr.bf16.mxu0 0
    %341 = vmatpush1.bf16.msra.mxu0 %v306
    %342 = vmatprep.subr.bf16.mxu0 0
    %343 = vmatpush1.bf16.msra.mxu0 %v305
    %344 = vmatprep.subr.bf16.mxu0 0
    %345 = vmatpush2.bf16.msra.mxu0 0
    %346 = vmatprep.subr.bf16.mxu0 0
    %347 = vmatpush2.bf16.msra.mxu0 0
    %348 = vmatprep.subr.bf16.mxu0 0
    %349 = vmatpush2.bf16.msra.mxu0 0
    %350 = vmatprep.subr.bf16.mxu0 0
    %351 = vmatpush2.bf16.msra.mxu0 0
    %352 = vmatprep.subr.bf16.mxu0 0
    %353 = vmatpush2.bf16.msra.mxu0 0
    %354 = vmatprep.subr.bf16.mxu0 0
    %355 = vmatpush2.bf16.msra.mxu0 0
    %356 = vmatprep.subr.bf16.mxu0 0
    %357 = vmatpush2.bf16.msra.mxu0 0
    %358 = vmatprep.subr.bf16.mxu0 0
    %359 = vmatpush2.bf16.msra.mxu0 0
    %360 = vmatprep.mubr.bf16.mxu0 0
    %361 = vmatmul.mubr.bf16.gmra.mxu0 %v326
    %v362 = vpop.f32.mrf.mxu0
    %v363 = vadd.f32 %v312, %v362
    %v364 = vpop.f32.mrf.mxu0
    %v365 = vpop.f32.mrf.mxu0
    %v366 = vadd.f32 %v317, %v365
    %v367 = vpop.f32.mrf.mxu0
    %368 = vdwg.mxu0
    %v369 = vmax.f32 %v363, 0.0
    %v370 = vmax.f32 %v366, 0.0
    %v371 = vld [vmem:[%s7] sm:$0xf]
    %v372 = vpack.c.bf16 %v370, %v369
    %v373 = vld [vmem:[%s8] sm:$0xff]
    %375 = vset.pattern.permute.xlu0 0
    %376 = vperm.xlu0 %375, %v373
    %v377 = vpop.permute.xlu0 %376
    %vm379 = vcmask 130048
    %v381 = vsel %vm379, %v371, 0
    %383 = vmatprep.subr.bf16.mxu0 0
    %384 = vmatpush1.bf16.msra.mxu0 0
    %385 = vmatprep.subr.bf16.mxu0 0
    %386 = vmatpush1.bf16.msra.mxu0 0
    %387 = vmatprep.subr.bf16.mxu0 0
    %388 = vmatpush1.bf16.msra.mxu0 0
    %389 = vmatprep.subr.bf16.mxu0 0
    %390 = vmatpush1.bf16.msra.mxu0 0
    %391 = vmatprep.subr.bf16.mxu0 0
    %392 = vmatpush1.bf16.msra.mxu0 0
    %393 = vmatprep.subr.bf16.mxu0 0
    %394 = vmatpush1.bf16.msra.mxu0 0
    %395 = vmatprep.subr.bf16.mxu0 0
    %396 = vmatpush1.bf16.msra.mxu0 0
    %397 = vmatprep.subr.bf16.mxu0 0
    %398 = vmatpush1.bf16.msra.mxu0 %v372
    %399 = vmatprep.subr.bf16.mxu0 0
    %400 = vmatpush2.bf16.msra.mxu0 0
    %401 = vmatprep.subr.bf16.mxu0 0
    %402 = vmatpush2.bf16.msra.mxu0 0
    %403 = vmatprep.subr.bf16.mxu0 0
    %404 = vmatpush2.bf16.msra.mxu0 0
    %405 = vmatprep.subr.bf16.mxu0 0
    %406 = vmatpush2.bf16.msra.mxu0 0
    %407 = vmatprep.subr.bf16.mxu0 0
    %408 = vmatpush2.bf16.msra.mxu0 0
    %409 = vmatprep.subr.bf16.mxu0 0
    %410 = vmatpush2.bf16.msra.mxu0 0
    %411 = vmatprep.subr.bf16.mxu0 0
    %412 = vmatpush2.bf16.msra.mxu0 0
    %413 = vmatprep.subr.bf16.mxu0 0
    %414 = vmatpush2.bf16.msra.mxu0 0
    %415 = vmatprep.mubr.bf16.mxu0 0
    %416 = vmatmul.mubr.bf16.gmra.mxu0 %v381
    %v417 = vpop.f32.mrf.mxu0
    %v418 = vadd.f32 %v377, %v417
    %v419 = vpop.f32.mrf.mxu0
    %v420 = vpop.f32.mrf.mxu0
    %v421 = vpop.f32.mrf.mxu0
    %422 = vdwg.mxu0
    %423 = vst [vmem:[#allocation2] sm:$0xff] %v418
    // Predicated region
    $region38: #{tpu_custom_call.1} parent=1 // pred_check
      _
    $region39: #{tpu_custom_call.1} parent=1 // pred_check_branch
      %425 = sbr.rel (0) target = $region41
    $region40: #{tpu_custom_call.1} parent=1 // pred_region
      %s427 = ssub.s32 128, 128
      %428 = vsyncadd [#allocation3], %s427
      %s430 = sshll.u32 [#allocation2], 4
      %s431 = int_to_ptr.vmem [resolvable:$true] %s430
      %433 = dma.vmem_to_hbm [thread:$0]  %s431, 128, %s9, [#allocation3]
    $region41: #{tpu_custom_call.1} parent=1 // pred_fallthru
      _
    // Predicated region
    $region42: #{tpu_custom_call.1} parent=1 // pred_check
      _
    $region43: #{tpu_custom_call.1} parent=1 // pred_check_branch
      %435 = sbr.rel (0) target = $region45
    $region44: #{tpu_custom_call.1} parent=1 // pred_region
      %436 = dma.done [#allocation3], 128
    $region45: #{tpu_custom_call.1} parent=1 // pred_fallthru
      _
    %437 = vsyncpa [#allocation3], 1

</llo_original>
